<compile_context>
chip_gen: v7x
topology: tpu7x:2x2x1
jax: 0.10.0
libtpu: 0.0.40
codegen_flags: <defaults>
</compile_context>

<pallas_src>
import functools

import jax
import jax.numpy as jnp
from jax.experimental import pallas as pl
from jax.experimental.pallas import tpu as pltpu


def _round_up(x, m):
    return ((x + m - 1) // m) * m


# ---------------------------------------------------------------------------
# Kernel
# ---------------------------------------------------------------------------
def _classifier1l_body(x_ref, w1_ref, b1_ref, w2_ref, b2_ref, mask_ref,
                       o_ref, acc_ref):
    """Grid = (batch_tiles, vocab_tiles); vocab (reduction) axis is innermost.

    x_ref    : [tb, tk]    compute dtype (bf16)
    w1_ref   : [tk, H]     compute dtype (fc1 weight, pre-transposed)
    b1_ref   : [1, H]      f32
    w2_ref   : [H, O_pad]  compute dtype (fc2 weight, pre-transposed + padded)
    b2_ref   : [1, O_pad]  f32
    mask_ref : [tb, H]     f32 pre-scaled inverted-dropout mask (or None)
    o_ref    : [tb, O_pad] f32 (lane-dense padded output)
    acc_ref  : [tb, H]     f32 VMEM scratch (fc1 accumulator)
    """
    k = pl.program_id(1)
    last_k = pl.num_programs(1) - 1

    @pl.when(k == 0)
    def _init():
        # Fold the fc1 bias into the accumulator init (saves a full-H VPU pass).
        acc_ref[...] = jnp.broadcast_to(b1_ref[...], acc_ref.shape)

    # Partial fc1 on the MXU: natural [tb, tk] @ [tk, H], f32 accumulation.
    acc_ref[...] += jnp.dot(x_ref[...], w1_ref[...],
                            preferred_element_type=jnp.float32)

    @pl.when(k == last_k)
    def _finalize():
        h = jnp.maximum(acc_ref[...], 0.0)          # ReLU in f32 on the VPU
        if mask_ref is not None:
            h = h * mask_ref[...]                   # fused inverted dropout
        out = jnp.dot(h.astype(w2_ref.dtype), w2_ref[...],
                      preferred_element_type=jnp.float32)
        o_ref[...] = (out + b2_ref[...]).astype(o_ref.dtype)


def _kernel_eval(x_ref, w1_ref, b1_ref, w2_ref, b2_ref, o_ref, acc_ref):
    _classifier1l_body(x_ref, w1_ref, b1_ref, w2_ref, b2_ref, None,
                       o_ref, acc_ref)


def _kernel_train(x_ref, w1_ref, b1_ref, w2_ref, b2_ref, mask_ref, o_ref,
                  acc_ref):
    _classifier1l_body(x_ref, w1_ref, b1_ref, w2_ref, b2_ref, mask_ref,
                       o_ref, acc_ref)


# ---------------------------------------------------------------------------
# One-time parameter prep (call ONCE, cache the result, reuse every forward)
# ---------------------------------------------------------------------------
def prepare_params(params, *, compute_dtype=jnp.bfloat16):
    """Casts/transposes/pads the PyTorch-layout weights once.

    params: w1 [H, V], b1 [H], w2 [O, H], b2 [O] (PyTorch nn.Linear layout).
    Returns dict with MXU-natural layouts:
      w1t [V_pad, H] compute_dtype, b1 [1, H] f32,
      w2t [H, O_pad] compute_dtype, b2 [1, O_pad] f32, plus shape metadata.
    """
    w1 = jnp.asarray(params["w1"])
    b1 = jnp.asarray(params["b1"])
    w2 = jnp.asarray(params["w2"])
    b2 = jnp.asarray(params["b2"])
    H, V = w1.shape
    O = w2.shape[0]

    # Pad the vocab (reduction) dim to a 256 multiple (MXU-K friendly) and the
    # tiny output dim to a full 128 lane (unmasked vst on the output store).
    V_pad = V if V < 256 else _round_up(V, 256)
    O_pad = _round_up(O, 128)

    w1t = jnp.pad(w1.astype(compute_dtype).T, ((0, V_pad - V), (0, 0)))
    w2t = jnp.pad(w2.astype(compute_dtype).T, ((0, 0), (0, O_pad - O)))
    b1r = b1.astype(jnp.float32).reshape(1, H)
    b2r = jnp.pad(b2.astype(jnp.float32), (0, O_pad - O)).reshape(1, O_pad)

    return {"w1t": w1t, "b1": b1r, "w2t": w2t, "b2": b2r,
            "vocab_size": int(V), "hidden_dim": int(H), "output_dim": int(O)}


def _default_batch_tiles():
    # v7x has two TensorCores per chip: keep exactly 2 batch tiles so the
    # "parallel" batch grid axis gives each TC its own tile (each streams w1
    # over its own HBM path).  Single-TC chips (v5e/v6e) want the whole batch
    # in one tile so w1 is streamed from HBM exactly once.
    try:
        kind = jax.devices()[0].device_kind.lower()
        if "v7" in kind:
            return 2
    except Exception:
        pass
    return 1


def _pick_tk(V_pad, tk_max):
    if V_pad <= tk_max:
        return V_pad
    best, t = 256, 256
    while t <= tk_max:
        if V_pad % t == 0:
            best = t
        t += 256
    return best


# ---------------------------------------------------------------------------
# Forward
# ---------------------------------------------------------------------------
def classifier1l_forward(x, prepped, *, drop_rate=0.0, training=False,
                         rng=None, tk=None, batch_tiles=None, tk_max=2048):
    """Fused Classifier1L forward.  x: [B, V] float.  Returns [B, O] f32.

    `prepped` must come from prepare_params() (cached across calls).
    In training mode pass a fresh `rng` key per step (PRNGKey), or the dropout
    mask repeats across forward passes.
    """
    w1t, b1, w2t, b2 = prepped["w1t"], prepped["b1"], prepped["w2t"], prepped["b2"]
    V_pad, H = w1t.shape
    O_pad = w2t.shape[1]
    V, O = prepped["vocab_size"], prepped["output_dim"]
    B, Vx = x.shape
    assert Vx == V, f"x has vocab dim {Vx}, params expect {V}"

    compute_dtype = w1t.dtype
    itemsize = jnp.dtype(compute_dtype).itemsize
    use_dropout = bool(training) and float(drop_rate) > 0.0

    # ---- batch tiling: full batch per tile on 1-TC chips, 2 tiles on v7x ----
    if batch_tiles is None:
        batch_tiles = _default_batch_tiles()
    if B % batch_tiles != 0 or (batch_tiles > 1 and (B // batch_tiles) % 8 != 0):
        batch_tiles = 1            # single full-batch tile is always legal
    tb = B // batch_tiles

    # ---- vocab tiling ----
    if tk is None:
        tk = _pick_tk(V_pad, tk_max)
    assert V_pad % tk == 0, f"tk={tk} must divide padded vocab {V_pad}"

    # ---- generation-safe VMEM budget over ALL resident buffers ----
    VMEM_BUDGET = 48 * 1024 * 1024       # headroom under v7x's 64 MiB physical

    def vmem_needed(tk_, tb_):
        n = 2 * tb_ * tk_ * itemsize     # x tiles (double-buffered)
        n += 2 * tk_ * H * itemsize      # fc1 weight tiles (double-buffered)
        n += 2 * H * O_pad * itemsize    # fc2 weight block
        n += 2 * (H + O_pad) * 4         # biases (f32)
        n += 2 * tb_ * O_pad * 4         # output block (f32)
        n += tb_ * H * 4                 # accumulator scratch (f32)
        if use_dropout:
            n += 2 * tb_ * H * 4         # dropout mask (f32)
        return n

    while vmem_needed(tk, tb) > VMEM_BUDGET:
        smaller_tk = [t for t in range(256, tk, 256) if V_pad % t == 0]
        if smaller_tk:
            tk = smaller_tk[-1]
        elif tb % 2 == 0 and (tb // 2) % 8 == 0 and B % (tb // 2) == 0:
            tb //= 2
        else:
            break
    needed = vmem_needed(tk, tb)
    assert needed <= VMEM_BUDGET, (
        f"tile config needs {needed >> 20} MiB VMEM (budget "
        f"{VMEM_BUDGET >> 20} MiB); reduce hidden/output dims or batch")
    batch_tiles = B // tb

    # ---- cheap per-call glue (activations only; weights were prepped once) ----
    xc = x.astype(compute_dtype)
    if V_pad > V:
        xc = jnp.pad(xc, ((0, 0), (0, V_pad - V)))

    args = [xc, w1t, b1, w2t, b2]
    in_specs = [
        pl.BlockSpec((tb, tk), lambda i, k: (i, k)),      # x tile
        pl.BlockSpec((tk, H), lambda i, k: (k, 0)),       # fc1 weight tile
        pl.BlockSpec((1, H), lambda i, k: (0, 0)),        # fc1 bias
        pl.BlockSpec((H, O_pad), lambda i, k: (0, 0)),    # fc2 weight
        pl.BlockSpec((1, O_pad), lambda i, k: (0, 0)),    # fc2 bias
    ]

    if use_dropout:
        if rng is None:
            raise ValueError("training-mode dropout needs an rng key")
        # TODO(synk): mask uses JAX's RNG stream, not torch.nn.Dropout's
        # (semantics match: zero with prob p, scale kept by 1/(1-p)).
        if float(drop_rate) >= 1.0:
            mask = jnp.zeros((B, H), jnp.float32)
        else:
            keep = jax.random.uniform(rng, (B, H)) >= float(drop_rate)
            mask = keep.astype(jnp.float32) * (1.0 / (1.0 - float(drop_rate)))
        args.append(mask)
        in_specs.append(pl.BlockSpec((tb, H), lambda i, k: (i, 0)))
        kernel = _kernel_train
    else:
        kernel = _kernel_eval

    grid = (batch_tiles, V_pad // tk)
    vmem_limit = int(min(max(needed + (4 << 20), 16 << 20), 48 << 20))

    bytes_accessed = (
        batch_tiles * V_pad * H * itemsize          # w1 streamed per batch tile
        + B * V_pad * itemsize                      # x
        + batch_tiles * (H * O_pad * itemsize + (H + O_pad) * 4)
        + B * O_pad * 4
        + (B * H * 4 if use_dropout else 0))

    out_padded = pl.pallas_call(
        kernel,
        out_shape=jax.ShapeDtypeStruct((B, O_pad), jnp.float32),
        grid=grid,
        in_specs=in_specs,
        out_specs=pl.BlockSpec((tb, O_pad), lambda i, k: (i, 0)),
        scratch_shapes=[pltpu.VMEM((tb, H), jnp.float32)],
        compiler_params=pltpu.CompilerParams(
            dimension_semantics=("parallel", "arbitrary"),
            vmem_limit_bytes=vmem_limit),
        cost_estimate=pl.CostEstimate(
            flops=2 * B * V_pad * H + 2 * B * H * O_pad,
            bytes_accessed=bytes_accessed,
            transcendentals=0),
    )(*args)

    return out_padded[:, :O]


def init_params(key, vocab_size, hidden_dim, output_dim, dtype=jnp.float32):
    """Synthetic init mirroring nn.Linear's uniform(-1/sqrt(fan_in), +)."""
    k1, k2, k3, k4 = jax.random.split(key, 4)
    bound1 = 1.0 / jnp.sqrt(vocab_size)
    bound2 = 1.0 / jnp.sqrt(hidden_dim)
    return {
        "w1": jax.random.uniform(k1, (hidden_dim, vocab_size), dtype,
                                 minval=-bound1, maxval=bound1),
        "b1": jax.random.uniform(k2, (hidden_dim,), dtype,
                                 minval=-bound1, maxval=bound1),
        "w2": jax.random.uniform(k3, (output_dim, hidden_dim), dtype,
                                 minval=-bound2, maxval=bound2),
        "b2": jax.random.uniform(k4, (output_dim,), dtype,
                                 minval=-bound2, maxval=bound2),
    }


if __name__ == "__main__":
    # Small but tile-friendly shapes consistent with the module.
    B, VOCAB, HIDDEN, OUT = 64, 1024, 256, 10
    DROP = 0.1

    key = jax.random.PRNGKey(0)
    kx, kp, kd = jax.random.split(key, 3)
    x = jax.random.normal(kx, (B, VOCAB), dtype=jnp.float32)
    params = init_params(kp, VOCAB, HIDDEN, OUT)

    # One-time prep (cache & reuse): bf16 weights, transposed + padded layouts.
    prepped = prepare_params(params)

    # Eval mode (dropout identity), tk=512 -> a 2-step vocab reduction.
    out = classifier1l_forward(x, prepped, drop_rate=DROP, training=False,
                               tk=512)
    out = jax.block_until_ready(out)
    assert out.shape == (B, OUT)

    # Pure-JAX reference with the same bf16-matmul / f32-accumulate recipe.
    w1b = params["w1"].astype(jnp.bfloat16)
    w2b = params["w2"].astype(jnp.bfloat16)
    xb = x.astype(jnp.bfloat16)
    h_ref = jnp.maximum(
        jnp.dot(xb, w1b.T, preferred_element_type=jnp.float32)
        + params["b1"], 0.0)
    ref = jnp.dot(h_ref.astype(jnp.bfloat16), w2b.T,
                  preferred_element_type=jnp.float32) + params["b2"]
    err = float(jnp.max(jnp.abs(out - ref)))
    assert jnp.allclose(out, ref, atol=2e-2, rtol=2e-2), f"max abs err {err}"

    # Two batch tiles (the v7x megacore path) must also match.
    out2 = classifier1l_forward(x, prepped, drop_rate=DROP, training=False,
                                tk=512, batch_tiles=2)
    out2 = jax.block_until_ready(out2)
    err2 = float(jnp.max(jnp.abs(out2 - ref)))
    assert jnp.allclose(out2, ref, atol=2e-2, rtol=2e-2), f"max abs err {err2}"

    # Training mode: wrapper-generated dropout mask, fused multiply in-kernel.
    out_tr = classifier1l_forward(x, prepped, drop_rate=DROP, training=True,
                                  rng=kd, tk=512)
    out_tr = jax.block_until_ready(out_tr)
    keep = (jax.random.uniform(kd, (B, HIDDEN)) >= DROP).astype(jnp.float32)
    mask_ref = keep * (1.0 / (1.0 - DROP))
    h_dr = h_ref * mask_ref
    ref_tr = jnp.dot(h_dr.astype(jnp.bfloat16), w2b.T,
                     preferred_element_type=jnp.float32) + params["b2"]
    assert out_tr.shape == (B, OUT)
    err_tr = float(jnp.max(jnp.abs(out_tr - ref_tr)))
    assert jnp.allclose(out_tr, ref_tr, atol=2e-2, rtol=2e-2), (
        f"training max abs err {err_tr}")

    print("KERNEL_OK")
</pallas_src>

<mosaic_0001>
module attributes {stable_mosaic.version = 11 : i64} {
  func.func @_kernel_eval(%arg0: i32, %arg1: i32, %arg2: memref<64x512xbf16, #tpu.memory_space<vmem>>, %arg3: memref<512x256xbf16, #tpu.memory_space<vmem>>, %arg4: memref<1x256xf32, #tpu.memory_space<vmem>>, %arg5: memref<256x128xbf16, #tpu.memory_space<vmem>>, %arg6: memref<1x128xf32, #tpu.memory_space<vmem>>, %arg7: memref<64x128xf32, #tpu.memory_space<vmem>>, %arg8: memref<64x256xf32, #tpu.memory_space<vmem>>) attributes {dimension_semantics = [#tpu.dimension_semantics<parallel>, #tpu.dimension_semantics<arbitrary>], iteration_bounds = array<i64: 1, 2>, scalar_prefetch = 0 : i64, scratch_operands = 1 : i64, tpu.core_type = #tpu.core_type<tc>, window_params = [{transform_indices = @transform_0, window_bounds = array<i64: 64, 512>}, {transform_indices = @transform_1, window_bounds = array<i64: 512, 256>}, {pipeline_mode = #tpu.pipeline_mode<synchronous>, transform_indices = @transform_2, window_bounds = array<i64: 1, 256>}, {pipeline_mode = #tpu.pipeline_mode<synchronous>, transform_indices = @transform_3, window_bounds = array<i64: 256, 128>}, {pipeline_mode = #tpu.pipeline_mode<synchronous>, transform_indices = @transform_4, window_bounds = array<i64: 1, 128>}, {transform_indices = @transform_5, window_bounds = array<i64: 64, 128>}]} {
    %c0_i32 = arith.constant 0 : i32
    %0 = arith.cmpi eq, %arg1, %c0_i32 : i32
    %1 = arith.extui %0 : i1 to i32
    %c0_i32_0 = arith.constant 0 : i32
    %2 = arith.cmpi ne, %1, %c0_i32_0 : i32
    scf.if %2 {
      %c0_9 = arith.constant 0 : index
      %c0_10 = arith.constant 0 : index
      %12 = vector.load %arg4[%c0_9, %c0_10] : memref<1x256xf32, #tpu.memory_space<vmem>>, vector<1x256xf32>
      %13 = vector.shape_cast %12 : vector<1x256xf32> to vector<1x256xf32>
      %14 = vector.broadcast %13 : vector<1x256xf32> to vector<64x256xf32>
      %c0_11 = arith.constant 0 : index
      %c0_12 = arith.constant 0 : index
      %15 = vector.load %arg8[%c0_11, %c0_12] : memref<64x256xf32, #tpu.memory_space<vmem>>, vector<64x256xf32>
      tpu.vector_store %arg8[%c0_11, %c0_12], %14 {strides = array<i32>} : memref<64x256xf32, #tpu.memory_space<vmem>>, vector<64x256xf32>,
    } else {
    }
    %c0 = arith.constant 0 : index
    %c0_1 = arith.constant 0 : index
    %3 = vector.load %arg8[%c0, %c0_1] : memref<64x256xf32, #tpu.memory_space<vmem>>, vector<64x256xf32>
    %c0_2 = arith.constant 0 : index
    %c0_3 = arith.constant 0 : index
    %4 = vector.load %arg2[%c0_2, %c0_3] : memref<64x512xbf16, #tpu.memory_space<vmem>>, vector<64x512xbf16>
    %c0_4 = arith.constant 0 : index
    %c0_5 = arith.constant 0 : index
    %5 = vector.load %arg3[%c0_4, %c0_5] : memref<512x256xbf16, #tpu.memory_space<vmem>>, vector<512x256xbf16>
    %cst = arith.constant dense<0.000000e+00> : vector<64x256xf32>
    %6 = tpu.matmul %4, %5, %cst {dimension_numbers = #tpu.dot_dimension_numbers<[1], [0], [0], [1], [0, 0, 1, 1], [], []>} : vector<64x512xbf16>, vector<512x256xbf16>, vector<64x256xf32> -> vector<64x256xf32>
    %7 = arith.addf %3, %6 : vector<64x256xf32>
    %c0_6 = arith.constant 0 : index
    %c0_7 = arith.constant 0 : index
    %8 = vector.load %arg8[%c0_6, %c0_7] : memref<64x256xf32, #tpu.memory_space<vmem>>, vector<64x256xf32>
    tpu.vector_store %arg8[%c0_6, %c0_7], %7 {strides = array<i32>} : memref<64x256xf32, #tpu.memory_space<vmem>>, vector<64x256xf32>,
    %c1_i32 = arith.constant 1 : i32
    %9 = arith.cmpi eq, %arg1, %c1_i32 : i32
    %10 = arith.extui %9 : i1 to i32
    %c0_i32_8 = arith.constant 0 : i32
    %11 = arith.cmpi ne, %10, %c0_i32_8 : i32
    scf.if %11 {
      %c0_9 = arith.constant 0 : index
      %c0_10 = arith.constant 0 : index
      %12 = vector.load %arg8[%c0_9, %c0_10] : memref<64x256xf32, #tpu.memory_space<vmem>>, vector<64x256xf32>
      %cst_11 = arith.constant 0.000000e+00 : f32
      %13 = vector.broadcast %cst_11 : f32 to vector<64x256xf32>
      %14 = arith.maximumf %12, %13 : vector<64x256xf32>
      %15 = arith.truncf %14 : vector<64x256xf32> to vector<64x256xbf16>
      %c0_12 = arith.constant 0 : index
      %c0_13 = arith.constant 0 : index
      %16 = vector.load %arg5[%c0_12, %c0_13] : memref<256x128xbf16, #tpu.memory_space<vmem>>, vector<256x128xbf16>
      %cst_14 = arith.constant dense<0.000000e+00> : vector<64x128xf32>
      %17 = tpu.matmul %15, %16, %cst_14 {dimension_numbers = #tpu.dot_dimension_numbers<[1], [0], [0], [1], [0, 0, 1, 1], [], []>} : vector<64x256xbf16>, vector<256x128xbf16>, vector<64x128xf32> -> vector<64x128xf32>
      %c0_15 = arith.constant 0 : index
      %c0_16 = arith.constant 0 : index
      %18 = vector.load %arg6[%c0_15, %c0_16] : memref<1x128xf32, #tpu.memory_space<vmem>>, vector<1x128xf32>
      %19 = vector.broadcast %18 : vector<1x128xf32> to vector<64x128xf32>
      %20 = arith.addf %17, %19 : vector<64x128xf32>
      %c0_17 = arith.constant 0 : index
      %c0_18 = arith.constant 0 : index
      %21 = vector.load %arg7[%c0_17, %c0_18] : memref<64x128xf32, #tpu.memory_space<vmem>>, vector<64x128xf32>
      tpu.vector_store %arg7[%c0_17, %c0_18], %20 {strides = array<i32>} : memref<64x128xf32, #tpu.memory_space<vmem>>, vector<64x128xf32>,
    } else {
    }
    return
  }
  func.func @transform_0(%arg0: i32, %arg1: i32) -> (i32, i32) {
    %c0_i32 = arith.constant 0 : i32
    return %arg0, %arg1 : i32, i32
  }
  func.func @transform_1(%arg0: i32, %arg1: i32) -> (i32, i32) {
    %c0_i32 = arith.constant 0 : i32
    %c0_i32_0 = arith.constant 0 : i32
    return %arg1, %c0_i32 : i32, i32
  }
  func.func @transform_2(%arg0: i32, %arg1: i32) -> (i32, i32) {
    %c0_i32 = arith.constant 0 : i32
    %c0_i32_0 = arith.constant 0 : i32
    %c0_i32_1 = arith.constant 0 : i32
    return %c0_i32, %c0_i32_0 : i32, i32
  }
  func.func @transform_3(%arg0: i32, %arg1: i32) -> (i32, i32) {
    %c0_i32 = arith.constant 0 : i32
    %c0_i32_0 = arith.constant 0 : i32
    %c0_i32_1 = arith.constant 0 : i32
    return %c0_i32, %c0_i32_0 : i32, i32
  }
  func.func @transform_4(%arg0: i32, %arg1: i32) -> (i32, i32) {
    %c0_i32 = arith.constant 0 : i32
    %c0_i32_0 = arith.constant 0 : i32
    %c0_i32_1 = arith.constant 0 : i32
    return %c0_i32, %c0_i32_0 : i32, i32
  }
  func.func @transform_5(%arg0: i32, %arg1: i32) -> (i32, i32) {
    %c0_i32 = arith.constant 0 : i32
    %c0_i32_0 = arith.constant 0 : i32
    return %arg0, %c0_i32 : i32, i32
  }
}

</mosaic_0001>

<llo_original>
// kernel: tpu_custom_call.1
$region0: #{tpu_custom_call.1}
  #allocation0 [shape = 'u32[]', space=smem, size = 0x4, offset = 0x4, fixed_abs, tag = 'smem constant byte address 0x4 - core index']
  #allocation1 [shape = 'u32[144,128]{1,0:T(1,128)}', space=vmem, size = 0x12000, scoped, tag = 'internal scratch']
  #allocation2 [shape = 'f32[64,256]{1,0:T(8,128)}', space=vmem, size = 0x10000, scoped, tag = 'scratch operand']
  %s0 = inlined_call_operand.hbm [shape: bf16[64,1024], index: 0, kind: input, shape index: {}]
  %s1 = inlined_call_operand.hbm [shape: bf16[1024,256], index: 1, kind: input, shape index: {}]
  %s2 = inlined_call_operand.vmem [shape: f32[1,256], index: 2, kind: input, shape index: {}]
  %s3 = inlined_call_operand.hbm [shape: bf16[256,128], index: 3, kind: input, shape index: {}]
  %s4 = inlined_call_operand.vmem [shape: f32[1,128], index: 4, kind: input, shape index: {}]
  %s5 = inlined_call_operand.hbm [shape: f32[64,128], index: 5, kind: output, shape index: {}]
  %s6 = sld [smem:[#allocation0]]
  $region73: #{tpu_custom_call.1} parent=0
    _
  %s8 = ssub.s32 1, %s6
  %s9 = scalar_select 0, %s8, %s6
  $region1: #{tpu_custom_call.1} parent=0
    #allocation3 [shape = 'u8[131072]{0}', space=vmem, size = 0x20000, scoped, tag = 'input window, operand 0']
    #allocation4 [shape = 's32[2]{0}', space=sflag, size = 0x8, scoped, tag = 'scoped memory for tpu_custom_call.1']
    #allocation5 [shape = 's32[2]{0}', space=sflag, size = 0x8, scoped, tag = 'scoped memory for tpu_custom_call.1']
    #allocation6 [shape = 'u8[524288]{0}', space=vmem, size = 0x80000, scoped, tag = 'input window, operand 1']
    #allocation7 [shape = 's32[2]{0}', space=sflag, size = 0x8, scoped, tag = 'scoped memory for tpu_custom_call.1']
    #allocation8 [shape = 'u8[65536]{0}', space=vmem, size = 0x10000, scoped, tag = 'input window, operand 3, single buffered']
    #allocation9 [shape = 'u8[32768]{0}', space=vmem, size = 0x8000, scoped, tag = 'output window, operand 0, single buffered']
    %10 = vsyncpa [#allocation4], 0
    %s11 = scalar_lea.sflag [#allocation4], 1
    %12 = vsyncpa %s11, 0
    %13 = vsyncpa [#allocation7], 0
    %s14 = scalar_lea.sflag [#allocation7], 1
    %15 = vsyncpa %s14, 0
    %16 = vsyncpa [#allocation5], 0
    loop: start=0, step=1, limit=4
    $region2: #{tpu_custom_call.1} parent=1 // loop_pre_header
      _
    $region3: #{tpu_custom_call.1} parent=1 // loop_header
      %s18 = sphi 0, %s22
      %p19 = scmp.ge.s32.totalorder %s18, 4
      %s25 = sphi 0, %s37
      %s26 = sphi 0, %s33
      %s27 = sphi 0, %s25
      %s28 = sphi 0, %s26
      %s29 = sphi 0, %s27
      %s30 = sphi 0, %s28
      %s42 = sphi 0, %s44
      %s45 = sphi 0, %s42
      %s46 = sphi 0, %s45
      %s62 = sphi 0, %s46
      %s68 = sphi 0, %s70
      %s71 = sphi 0, %s68
      %s72 = sphi 0, %s71
      %s88 = sphi 0, %s72
      %s92 = sphi 0, %s92
      %s94 = sphi 0, %s92
      %s95 = sphi 0, %s94
      %s109 = sphi 0, %s95
      %s113 = sphi 0, %s113
      %s115 = sphi 0, %s113
      %s116 = sphi 0, %s115
      %s130 = sphi 0, %s116
      %s134 = sphi 0, %s134
      %s136 = sphi 0, %s134
      %s137 = sphi 0, %s136
      %s151 = sphi 0, %s137
      %s157 = sphi 0, %s159
      %s160 = sphi 0, %s157
      %s161 = sphi 0, %s160
      %s177 = sphi 0, %s161
    $region4: #{tpu_custom_call.1} parent=1 // loop_header_branch
      %21 = sbr.rel (%p19) target = $region8
    $region5: #{tpu_custom_call.1} parent=1 // loop_body
      %s23 = ssub.s32 %s18, 1
      %s24 = ssub.s32 %s18, 2
      %s31 = sadd.s32 1, %s26
      %p32 = scmp.ge.s32.totalorder %s31, 2
      %s33 = scalar_select %p32, 0, %s31
      %s34 = sadd.s32 1, %s25
      %s35 = scalar_select %p32, %s34, %s25
      %p36 = scmp.ge.s32.totalorder %s35, 1
      %s37 = scalar_select %p36, 0, %s35
      %s38 = ssub.s32 %s25, %s37
      %s39 = ssub.s32 %s26, %s33
      %s40 = sor.u32 %s38, %s39
      %p41 = scmp.eq.s32.totalorder %s40, 0
      %s43 = sadd.s32 %s42, 1
      %s44 = scalar_select %p41, %s42, %s43
      %p47 = pneg %p41
      %p48 = scmp.eq.s32.totalorder %s18, 1
      %p49 = por %p47, %p48
      %p50 = scmp.ne.s32.totalorder %s42, %s45
      %p51 = scmp.eq.s32.totalorder %s18, 0
      %p52 = por %p50, %p51
      %p53 = scmp.ne.s32.totalorder %s42, %s45
      %p54 = scmp.eq.s32.totalorder %s23, 1
      %p55 = por %p53, %p54
      %p56 = scmp.ne.s32.totalorder %s45, %s46
      %p57 = scmp.eq.s32.totalorder %s23, 0
      %p58 = por %p56, %p57
      %p59 = scmp.ne.s32.totalorder %s45, %s46
      %p60 = scmp.eq.s32.totalorder %s24, 1
      %p61 = por %p59, %p60
      %p63 = scmp.ne.s32.totalorder %s46, %s62
      %p64 = scmp.eq.s32.totalorder %s24, 0
      %p65 = por %p63, %p64
      %s66 = ssub.s32 %s26, %s33
      %p67 = scmp.eq.s32.totalorder %s66, 0
      %s69 = sadd.s32 %s68, 1
      %s70 = scalar_select %p67, %s68, %s69
      %p73 = pneg %p67
      %p74 = scmp.eq.s32.totalorder %s18, 1
      %p75 = por %p73, %p74
      %p76 = scmp.ne.s32.totalorder %s68, %s71
      %p77 = scmp.eq.s32.totalorder %s18, 0
      %p78 = por %p76, %p77
      %p79 = scmp.ne.s32.totalorder %s68, %s71
      %p80 = scmp.eq.s32.totalorder %s23, 1
      %p81 = por %p79, %p80
      %p82 = scmp.ne.s32.totalorder %s71, %s72
      %p83 = scmp.eq.s32.totalorder %s23, 0
      %p84 = por %p82, %p83
      %p85 = scmp.ne.s32.totalorder %s71, %s72
      %p86 = scmp.eq.s32.totalorder %s24, 1
      %p87 = por %p85, %p86
      %p89 = scmp.ne.s32.totalorder %s72, %s88
      %p90 = scmp.eq.s32.totalorder %s24, 0
      %p91 = por %p89, %p90
      %s93 = sadd.s32 %s92, 1
      %p96 = scmp.eq.s32.totalorder %s18, 1
      %p97 = scmp.ne.s32.totalorder %s92, %s94
      %p98 = scmp.eq.s32.totalorder %s18, 0
      %p99 = por %p97, %p98
      %p100 = scmp.ne.s32.totalorder %s92, %s94
      %p101 = scmp.eq.s32.totalorder %s23, 1
      %p102 = por %p100, %p101
      %p103 = scmp.ne.s32.totalorder %s94, %s95
      %p104 = scmp.eq.s32.totalorder %s23, 0
      %p105 = por %p103, %p104
      %p106 = scmp.ne.s32.totalorder %s94, %s95
      %p107 = scmp.eq.s32.totalorder %s24, 1
      %p108 = por %p106, %p107
      %p110 = scmp.ne.s32.totalorder %s95, %s109
      %p111 = scmp.eq.s32.totalorder %s24, 0
      %p112 = por %p110, %p111
      %s114 = sadd.s32 %s113, 1
      %p117 = scmp.eq.s32.totalorder %s18, 1
      %p118 = scmp.ne.s32.totalorder %s113, %s115
      %p119 = scmp.eq.s32.totalorder %s18, 0
      %p120 = por %p118, %p119
      %p121 = scmp.ne.s32.totalorder %s113, %s115
      %p122 = scmp.eq.s32.totalorder %s23, 1
      %p123 = por %p121, %p122
      %p124 = scmp.ne.s32.totalorder %s115, %s116
      %p125 = scmp.eq.s32.totalorder %s23, 0
      %p126 = por %p124, %p125
      %p127 = scmp.ne.s32.totalorder %s115, %s116
      %p128 = scmp.eq.s32.totalorder %s24, 1
      %p129 = por %p127, %p128
      %p131 = scmp.ne.s32.totalorder %s116, %s130
      %p132 = scmp.eq.s32.totalorder %s24, 0
      %p133 = por %p131, %p132
      %s135 = sadd.s32 %s134, 1
      %p138 = scmp.eq.s32.totalorder %s18, 1
      %p139 = scmp.ne.s32.totalorder %s134, %s136
      %p140 = scmp.eq.s32.totalorder %s18, 0
      %p141 = por %p139, %p140
      %p142 = scmp.ne.s32.totalorder %s134, %s136
      %p143 = scmp.eq.s32.totalorder %s23, 1
      %p144 = por %p142, %p143
      %p145 = scmp.ne.s32.totalorder %s136, %s137
      %p146 = scmp.eq.s32.totalorder %s23, 0
      %p147 = por %p145, %p146
      %p148 = scmp.ne.s32.totalorder %s136, %s137
      %p149 = scmp.eq.s32.totalorder %s24, 1
      %p150 = por %p148, %p149
      %p152 = scmp.ne.s32.totalorder %s137, %s151
      %p153 = scmp.eq.s32.totalorder %s24, 0
      %p154 = por %p152, %p153
      %s155 = ssub.s32 %s25, %s37
      %p156 = scmp.eq.s32.totalorder %s155, 0
      %s158 = sadd.s32 %s157, 1
      %s159 = scalar_select %p156, %s157, %s158
      %p162 = pneg %p156
      %p163 = scmp.eq.s32.totalorder %s18, 1
      %p164 = por %p162, %p163
      %p165 = scmp.ne.s32.totalorder %s157, %s160
      %p166 = scmp.eq.s32.totalorder %s18, 0
      %p167 = por %p165, %p166
      %p168 = scmp.ne.s32.totalorder %s157, %s160
      %p169 = scmp.eq.s32.totalorder %s23, 1
      %p170 = por %p168, %p169
      %p171 = scmp.ne.s32.totalorder %s160, %s161
      %p172 = scmp.eq.s32.totalorder %s23, 0
      %p173 = por %p171, %p172
      %p174 = scmp.ne.s32.totalorder %s160, %s161
      %p175 = scmp.eq.s32.totalorder %s24, 1
      %p176 = por %p174, %p175
      %p178 = scmp.ne.s32.totalorder %s161, %s177
      %p179 = scmp.eq.s32.totalorder %s24, 0
      %p180 = por %p178, %p179
      %p181 = scmp.le.s32.totalorder 1, %s18
      %p182 = scmp.lt.s32.totalorder %s18, 3
      %p183 = pnand %p181, %p182
      %p184 = pneg %p183
      // Predicated region
      $region9: #{tpu_custom_call.1} parent=5 // pred_check
        _
      $region10: #{tpu_custom_call.1} parent=5 // pred_check_branch
        %186 = sbr.rel (%p183) target = $region12
      $region11: #{tpu_custom_call.1} parent=5 // pred_region
        %s187 = ssub.s32 %s18, 1
        // Predicated region
        $region13: #{tpu_custom_call.1} parent=11 // pred_check
          %p188 = pneg %p105
        $region14: #{tpu_custom_call.1} parent=11 // pred_check_branch
          %190 = sbr.rel (%p188) target = $region16
        $region15: #{tpu_custom_call.1} parent=11 // pred_region
          _
        $region16: #{tpu_custom_call.1} parent=11 // pred_fallthru
          _
        // Predicated region
        $region17: #{tpu_custom_call.1} parent=11 // pred_check
          %p191 = pneg %p126
        $region18: #{tpu_custom_call.1} parent=11 // pred_check_branch
          %193 = sbr.rel (%p191) target = $region20
        $region19: #{tpu_custom_call.1} parent=11 // pred_region
          %s195 = ssub.s32 2048, 2048
          %196 = vsyncadd [#allocation7], %s195
          %s197 = sshll.u32 [#allocation8], 4
          %s198 = int_to_ptr.vmem [resolvable:$true] %s197
          %203 = dma.hbm_to_vmem [thread:$0]  %s3, 2048, %s198, [#allocation7], 64, 64, 4
        $region20: #{tpu_custom_call.1} parent=11 // pred_fallthru
          _
        // Predicated region
        $region21: #{tpu_custom_call.1} parent=11 // pred_check
          %p204 = pneg %p147
        $region22: #{tpu_custom_call.1} parent=11 // pred_check_branch
          %206 = sbr.rel (%p204) target = $region24
        $region23: #{tpu_custom_call.1} parent=11 // pred_region
          _
        $region24: #{tpu_custom_call.1} parent=11 // pred_fallthru
          _
      $region12: #{tpu_custom_call.1} parent=5 // pred_fallthru
        _
      %p207 = scmp.lt.s32.totalorder %s18, 2
      // Predicated region
      $region25: #{tpu_custom_call.1} parent=5 // pred_check
        %p208 = pneg %p207
      $region26: #{tpu_custom_call.1} parent=5 // pred_check_branch
        %210 = sbr.rel (%p208) target = $region28
      $region27: #{tpu_custom_call.1} parent=5 // pred_region
        // Predicated region
        $region29: #{tpu_custom_call.1} parent=27 // pred_check
          %p211 = pneg %p52
        $region30: #{tpu_custom_call.1} parent=27 // pred_check_branch
          %213 = sbr.rel (%p211) target = $region32
        $region31: #{tpu_custom_call.1} parent=27 // pred_region
          %s214 = sand.u32 %s42, 1
          %s215 = scalar_lea.sflag [#allocation4], %s214
          %s216 = sand.u32 %s42, 1
          %s217 = smul.addr %s216, 128
          %s218 = scalar_lea.vmem [#allocation3], %s217
          %s219 = smul.u32 8, %s25
          %s220 = smul.u32 4, %s26
          %s222 = ssub.s32 2048, 2048
          %223 = vsyncadd %s215, %s222
          %s224 = smul.addr %s219, 8
          %s225 = sadd.s32 %s220, %s224
          %s226 = smul.addr %s225, 64
          %s227 = scalar_lea.hbm %s0, %s226
          %s228 = sshll.u32 %s218, 4
          %s229 = int_to_ptr.vmem [resolvable:$true] %s228
          %234 = dma.hbm_to_vmem [thread:$0]  %s227, 2048, %s229, %s215, 512, 256, 16
        $region32: #{tpu_custom_call.1} parent=27 // pred_fallthru
          _
        // Predicated region
        $region33: #{tpu_custom_call.1} parent=27 // pred_check
          %p235 = pneg %p78
        $region34: #{tpu_custom_call.1} parent=27 // pred_check_branch
          %237 = sbr.rel (%p235) target = $region36
        $region35: #{tpu_custom_call.1} parent=27 // pred_region
          %s238 = sand.u32 %s18, 1
          %s239 = scalar_lea.sflag [#allocation7], %s238
          %s240 = sand.u32 %s68, 1
          %s241 = smul.addr %s240, 512
          %s242 = scalar_lea.vmem [#allocation6], %s241
          %s243 = smul.u32 64, %s26
          %s245 = ssub.s32 8192, 8192
          %246 = vsyncadd %s239, %s245
          %s247 = smul.addr %s243, 2
          %s248 = smul.addr %s247, 64
          %s249 = scalar_lea.hbm %s1, %s248
          %s250 = sshll.u32 %s242, 4
          %s251 = int_to_ptr.vmem [resolvable:$true] %s250
          %256 = dma.hbm_to_vmem [thread:$0]  %s249, 8192, %s251, %s239, 128, 128, 8
        $region36: #{tpu_custom_call.1} parent=27 // pred_fallthru
          _
      $region28: #{tpu_custom_call.1} parent=5 // pred_fallthru
        _
      %p257 = scmp.le.s32.totalorder 1, %s18
      %p258 = scmp.lt.s32.totalorder %s18, 3
      %p259 = pnand %p257, %p258
      %p260 = pneg %p259
      // Predicated region
      $region37: #{tpu_custom_call.1} parent=5 // pred_check
        _
      $region38: #{tpu_custom_call.1} parent=5 // pred_check_branch
        %262 = sbr.rel (%p259) target = $region40
      $region39: #{tpu_custom_call.1} parent=5 // pred_region
        %s263 = ssub.s32 %s18, 1
        %s264 = sand.u32 %s45, 1
        %s265 = scalar_lea.sflag [#allocation4], %s264
        %s266 = sand.u32 %s45, 1
        %s267 = smul.addr %s266, 128
        %s268 = scalar_lea.vmem [#allocation3], %s267
        // Predicated region
        $region41: #{tpu_custom_call.1} parent=39 // pred_check
          %p269 = pneg %p58
        $region42: #{tpu_custom_call.1} parent=39 // pred_check_branch
          %271 = sbr.rel (%p269) target = $region44
        $region43: #{tpu_custom_call.1} parent=39 // pred_region
          %272 = dma.done %s265, 2048
        $region44: #{tpu_custom_call.1} parent=39 // pred_fallthru
          _
        %s273 = sand.u32 %s23, 1
        %s274 = scalar_lea.sflag [#allocation7], %s273
        %s275 = sand.u32 %s71, 1
        %s276 = smul.addr %s275, 512
        %s277 = scalar_lea.vmem [#allocation6], %s276
        // Predicated region
        $region45: #{tpu_custom_call.1} parent=39 // pred_check
          %p278 = pneg %p84
        $region46: #{tpu_custom_call.1} parent=39 // pred_check_branch
          %280 = sbr.rel (%p278) target = $region48
        $region47: #{tpu_custom_call.1} parent=39 // pred_region
          %281 = dma.done %s274, 8192
        $region48: #{tpu_custom_call.1} parent=39 // pred_fallthru
          _
        // Predicated region
        $region49: #{tpu_custom_call.1} parent=39 // pred_check
          %p282 = pneg %p126
        $region50: #{tpu_custom_call.1} parent=39 // pred_check_branch
          %284 = sbr.rel (%p282) target = $region52
        $region51: #{tpu_custom_call.1} parent=39 // pred_region
          %285 = dma.done [#allocation7], 2048
        $region52: #{tpu_custom_call.1} parent=39 // pred_fallthru
          _
        %s286 = sand.u32 %s45, 1
        %s287 = scalar_lea.sflag [#allocation4], %s286
        %s288 = sand.u32 %s45, 1
        %s289 = smul.addr %s288, 128
        %s290 = scalar_lea.vmem [#allocation3], %s289
        %p291 = pneg %p58
        %p292 = pneg %p55
        %s293 = sand.u32 %s23, 1
        %s294 = scalar_lea.sflag [#allocation7], %s293
        %s295 = sand.u32 %s71, 1
        %s296 = smul.addr %s295, 512
        %s297 = scalar_lea.vmem [#allocation6], %s296
        %p298 = pneg %p84
        %p299 = pneg %p81
        %p300 = pneg %p105
        %p301 = pneg %p102
        %p302 = pneg %p126
        %p303 = pneg %p123
        %p304 = pneg %p147
        %p305 = pneg %p144
        %p306 = pneg %p173
        %p307 = pneg %p170
        %s308 = smul.u32 8, %s27
        %s309 = smul.u32 4, %s28
        %s310 = smul.u32 64, %s28
        %s311 = smul.u32 8, %s27
        %p313 = scmp.eq.s32.totalorder %s28, 0
        // Predicated region
        $region53: #{tpu_custom_call.1} parent=39 // pred_check
          %p314 = pneg %p313
        $region54: #{tpu_custom_call.1} parent=39 // pred_check_branch
          %316 = sbr.rel (%p314) target = $region56
        $region55: #{tpu_custom_call.1} parent=39 // pred_region
          %v317 = vld [vmem:[%s2] sm:$0x3]
          %v319 = vlaneseq
          %v320 = vshrl.u32 %v319, 7
          %v321 = vsub.s32 0, %v320
          %v322 = vrot.slane %v317, %v321
          %v323 = vlaneseq
          %v324 = vshrl.u32 %v323, 7
          %v325 = vsub.s32 1, %v324
          %v326 = vrot.slane %v317, %v325
          %329 = vst [vmem:[#allocation2] sm:$0xff] %v322
          %330 = vst [vmem:[#allocation2 + $0x8] sm:$0xff] %v326
          %331 = vst [vmem:[#allocation2 + $0x10] sm:$0xff] %v322
          %332 = vst [vmem:[#allocation2 + $0x18] sm:$0xff] %v326
          %333 = vst [vmem:[#allocation2 + $0x20] sm:$0xff] %v322
          %334 = vst [vmem:[#allocation2 + $0x28] sm:$0xff] %v326
          %335 = vst [vmem:[#allocation2 + $0x30] sm:$0xff] %v322
          %336 = vst [vmem:[#allocation2 + $0x38] sm:$0xff] %v326
          %337 = vst [vmem:[#allocation2 + $0x40] sm:$0xff] %v322
          %338 = vst [vmem:[#allocation2 + $0x48] sm:$0xff] %v326
          %339 = vst [vmem:[#allocation2 + $0x50] sm:$0xff] %v322
          %340 = vst [vmem:[#allocation2 + $0x58] sm:$0xff] %v326
          %341 = vst [vmem:[#allocation2 + $0x60] sm:$0xff] %v322
          %342 = vst [vmem:[#allocation2 + $0x68] sm:$0xff] %v326
          %343 = vst [vmem:[#allocation2 + $0x70] sm:$0xff] %v322
          %344 = vst [vmem:[#allocation2 + $0x78] sm:$0xff] %v326
        $region56: #{tpu_custom_call.1} parent=39 // pred_fallthru
          _
        %v345 = vld [vmem:[#allocation2] sm:$0xff]
        %v346 = vld [vmem:[#allocation2 + $0x8] sm:$0xff]
        %v347 = vld [vmem:[#allocation2 + $0x10] sm:$0xff]
        %v348 = vld [vmem:[#allocation2 + $0x18] sm:$0xff]
        %v349 = vld [vmem:[#allocation2 + $0x20] sm:$0xff]
        %v350 = vld [vmem:[#allocation2 + $0x28] sm:$0xff]
        %v351 = vld [vmem:[#allocation2 + $0x30] sm:$0xff]
        %v352 = vld [vmem:[#allocation2 + $0x38] sm:$0xff]
        %v353 = vld [vmem:[#allocation2 + $0x40] sm:$0xff]
        %v354 = vld [vmem:[#allocation2 + $0x48] sm:$0xff]
        %v355 = vld [vmem:[#allocation2 + $0x50] sm:$0xff]
        %v356 = vld [vmem:[#allocation2 + $0x58] sm:$0xff]
        %v357 = vld [vmem:[#allocation2 + $0x60] sm:$0xff]
        %v358 = vld [vmem:[#allocation2 + $0x68] sm:$0xff]
        %v359 = vld [vmem:[#allocation2 + $0x70] sm:$0xff]
        %v360 = vld [vmem:[#allocation2 + $0x78] sm:$0xff]
        %v361 = vld [vmem:[%s268] sm:$0xff]
        %v362 = vld [vmem:[%s268 + $0x8] sm:$0xff]
        %v363 = vld [vmem:[%s268 + $0x10] sm:$0xff]
        %v364 = vld [vmem:[%s268 + $0x18] sm:$0xff]
        %v365 = vld [vmem:[%s268 + $0x20] sm:$0xff]
        %v366 = vld [vmem:[%s268 + $0x28] sm:$0xff]
        %v367 = vld [vmem:[%s268 + $0x30] sm:$0xff]
        %v368 = vld [vmem:[%s268 + $0x38] sm:$0xff]
        %v369 = vld [vmem:[%s268 + $0x40] sm:$0xff]
        %v370 = vld [vmem:[%s268 + $0x48] sm:$0xff]
        %v371 = vld [vmem:[%s268 + $0x50] sm:$0xff]
        %v372 = vld [vmem:[%s268 + $0x58] sm:$0xff]
        %v373 = vld [vmem:[%s268 + $0x60] sm:$0xff]
        %v374 = vld [vmem:[%s268 + $0x68] sm:$0xff]
        %v375 = vld [vmem:[%s268 + $0x70] sm:$0xff]
        %v376 = vld [vmem:[%s268 + $0x78] sm:$0xff]
        %v377 = vld [vmem:[%s277] sm:$0xff]
        %v378 = vld [vmem:[%s277 + $0x8] sm:$0xff]
        %v379 = vld [vmem:[%s277 + $0x10] sm:$0xff]
        %v380 = vld [vmem:[%s277 + $0x18] sm:$0xff]
        %v381 = vld [vmem:[%s277 + $0x20] sm:$0xff]
        %v382 = vld [vmem:[%s277 + $0x28] sm:$0xff]
        %v383 = vld [vmem:[%s277 + $0x30] sm:$0xff]
        %v384 = vld [vmem:[%s277 + $0x38] sm:$0xff]
        %v385 = vld [vmem:[%s277 + $0x40] sm:$0xff]
        %v386 = vld [vmem:[%s277 + $0x48] sm:$0xff]
        %v387 = vld [vmem:[%s277 + $0x50] sm:$0xff]
        %v388 = vld [vmem:[%s277 + $0x58] sm:$0xff]
        %v389 = vld [vmem:[%s277 + $0x60] sm:$0xff]
        %v390 = vld [vmem:[%s277 + $0x68] sm:$0xff]
        %v391 = vld [vmem:[%s277 + $0x70] sm:$0xff]
        %v392 = vld [vmem:[%s277 + $0x78] sm:$0xff]
        %v393 = vld [vmem:[%s277 + $0x80] sm:$0xff]
        %v394 = vld [vmem:[%s277 + $0x88] sm:$0xff]
        %v395 = vld [vmem:[%s277 + $0x90] sm:$0xff]
        %v396 = vld [vmem:[%s277 + $0x98] sm:$0xff]
        %v397 = vld [vmem:[%s277 + $0xa0] sm:$0xff]
        %v398 = vld [vmem:[%s277 + $0xa8] sm:$0xff]
        %v399 = vld [vmem:[%s277 + $0xb0] sm:$0xff]
        %v400 = vld [vmem:[%s277 + $0xb8] sm:$0xff]
        %v401 = vld [vmem:[%s277 + $0xc0] sm:$0xff]
        %v402 = vld [vmem:[%s277 + $0xc8] sm:$0xff]
        %v403 = vld [vmem:[%s277 + $0xd0] sm:$0xff]
        %v404 = vld [vmem:[%s277 + $0xd8] sm:$0xff]
        %v405 = vld [vmem:[%s277 + $0xe0] sm:$0xff]
        %v406 = vld [vmem:[%s277 + $0xe8] sm:$0xff]
        %v407 = vld [vmem:[%s277 + $0xf0] sm:$0xff]
        %v408 = vld [vmem:[%s277 + $0xf8] sm:$0xff]
        %v409 = vld [vmem:[%s277 + $0x100] sm:$0xff]
        %v410 = vld [vmem:[%s277 + $0x108] sm:$0xff]
        %v411 = vld [vmem:[%s277 + $0x110] sm:$0xff]
        %v412 = vld [vmem:[%s277 + $0x118] sm:$0xff]
        %v413 = vld [vmem:[%s277 + $0x120] sm:$0xff]
        %v414 = vld [vmem:[%s277 + $0x128] sm:$0xff]
        %v415 = vld [vmem:[%s277 + $0x130] sm:$0xff]
        %v416 = vld [vmem:[%s277 + $0x138] sm:$0xff]
        %v417 = vld [vmem:[%s277 + $0x140] sm:$0xff]
        %v418 = vld [vmem:[%s277 + $0x148] sm:$0xff]
        %v419 = vld [vmem:[%s277 + $0x150] sm:$0xff]
        %v420 = vld [vmem:[%s277 + $0x158] sm:$0xff]
        %v421 = vld [vmem:[%s277 + $0x160] sm:$0xff]
        %v422 = vld [vmem:[%s277 + $0x168] sm:$0xff]
        %v423 = vld [vmem:[%s277 + $0x170] sm:$0xff]
        %v424 = vld [vmem:[%s277 + $0x178] sm:$0xff]
        %v425 = vld [vmem:[%s277 + $0x180] sm:$0xff]
        %v426 = vld [vmem:[%s277 + $0x188] sm:$0xff]
        %v427 = vld [vmem:[%s277 + $0x190] sm:$0xff]
        %v428 = vld [vmem:[%s277 + $0x198] sm:$0xff]
        %v429 = vld [vmem:[%s277 + $0x1a0] sm:$0xff]
        %v430 = vld [vmem:[%s277 + $0x1a8] sm:$0xff]
        %v431 = vld [vmem:[%s277 + $0x1b0] sm:$0xff]
        %v432 = vld [vmem:[%s277 + $0x1b8] sm:$0xff]
        %v433 = vld [vmem:[%s277 + $0x1c0] sm:$0xff]
        %v434 = vld [vmem:[%s277 + $0x1c8] sm:$0xff]
        %v435 = vld [vmem:[%s277 + $0x1d0] sm:$0xff]
        %v436 = vld [vmem:[%s277 + $0x1d8] sm:$0xff]
        %v437 = vld [vmem:[%s277 + $0x1e0] sm:$0xff]
        %v438 = vld [vmem:[%s277 + $0x1e8] sm:$0xff]
        %v439 = vld [vmem:[%s277 + $0x1f0] sm:$0xff]
        %v440 = vld [vmem:[%s277 + $0x1f8] sm:$0xff]
        %v457 = vunpack.c.l.b16 %v361
        %v458 = vunpack.c.h.b16 %v361
        %v459 = vunpack.c.l.b16 %v362
        %v460 = vunpack.c.h.b16 %v362
        %v461 = vunpack.c.l.b16 %v363
        %v462 = vunpack.c.h.b16 %v363
        %v463 = vunpack.c.l.b16 %v364
        %v464 = vunpack.c.h.b16 %v364
        %v465 = vunpack.c.l.b16 %v365
        %v466 = vunpack.c.h.b16 %v365
        %v467 = vunpack.c.l.b16 %v366
        %v468 = vunpack.c.h.b16 %v366
        %v469 = vunpack.c.l.b16 %v367
        %v470 = vunpack.c.h.b16 %v367
        %v471 = vunpack.c.l.b16 %v368
        %v472 = vunpack.c.h.b16 %v368
        %v473 = vunpack.c.l.b16 %v369
        %v474 = vunpack.c.h.b16 %v369
        %v475 = vunpack.c.l.b16 %v370
        %v476 = vunpack.c.h.b16 %v370
        %v477 = vunpack.c.l.b16 %v371
        %v478 = vunpack.c.h.b16 %v371
        %v479 = vunpack.c.l.b16 %v372
        %v480 = vunpack.c.h.b16 %v372
        %v481 = vunpack.c.l.b16 %v373
        %v482 = vunpack.c.h.b16 %v373
        %v483 = vunpack.c.l.b16 %v374
        %v484 = vunpack.c.h.b16 %v374
        %v485 = vunpack.c.l.b16 %v375
        %v486 = vunpack.c.h.b16 %v375
        %v487 = vunpack.c.l.b16 %v376
        %v488 = vunpack.c.h.b16 %v376
        %v489 = vpack.c.b16 %v461, %v457
        %v490 = vpack.c.b16 %v462, %v458
        %v491 = vpack.c.b16 %v463, %v459
        %v492 = vpack.c.b16 %v464, %v460
        %v493 = vpack.c.b16 %v469, %v465
        %v494 = vpack.c.b16 %v470, %v466
        %v495 = vpack.c.b16 %v471, %v467
        %v496 = vpack.c.b16 %v472, %v468
        %v497 = vpack.c.b16 %v477, %v473
        %v498 = vpack.c.b16 %v478, %v474
        %v499 = vpack.c.b16 %v479, %v475
        %v500 = vpack.c.b16 %v480, %v476
        %v501 = vpack.c.b16 %v485, %v481
        %v502 = vpack.c.b16 %v486, %v482
        %v503 = vpack.c.b16 %v487, %v483
        %v504 = vpack.c.b16 %v488, %v484
        %v585 = vunpack.c.l.b16 %v377
        %v586 = vunpack.c.h.b16 %v377
        %v587 = vunpack.c.l.b16 %v378
        %v588 = vunpack.c.h.b16 %v378
        %v589 = vunpack.c.l.b16 %v379
        %v590 = vunpack.c.h.b16 %v379
        %v591 = vunpack.c.l.b16 %v380
        %v592 = vunpack.c.h.b16 %v380
        %v593 = vunpack.c.l.b16 %v381
        %v594 = vunpack.c.h.b16 %v381
        %v595 = vunpack.c.l.b16 %v382
        %v596 = vunpack.c.h.b16 %v382
        %v597 = vunpack.c.l.b16 %v383
        %v598 = vunpack.c.h.b16 %v383
        %v599 = vunpack.c.l.b16 %v384
        %v600 = vunpack.c.h.b16 %v384
        %v601 = vunpack.c.l.b16 %v385
        %v602 = vunpack.c.h.b16 %v385
        %v603 = vunpack.c.l.b16 %v386
        %v604 = vunpack.c.h.b16 %v386
        %v605 = vunpack.c.l.b16 %v387
        %v606 = vunpack.c.h.b16 %v387
        %v607 = vunpack.c.l.b16 %v388
        %v608 = vunpack.c.h.b16 %v388
        %v609 = vunpack.c.l.b16 %v389
        %v610 = vunpack.c.h.b16 %v389
        %v611 = vunpack.c.l.b16 %v390
        %v612 = vunpack.c.h.b16 %v390
        %v613 = vunpack.c.l.b16 %v391
        %v614 = vunpack.c.h.b16 %v391
        %v615 = vunpack.c.l.b16 %v392
        %v616 = vunpack.c.h.b16 %v392
        %v617 = vunpack.c.l.b16 %v393
        %v618 = vunpack.c.h.b16 %v393
        %v619 = vunpack.c.l.b16 %v394
        %v620 = vunpack.c.h.b16 %v394
        %v621 = vunpack.c.l.b16 %v395
        %v622 = vunpack.c.h.b16 %v395
        %v623 = vunpack.c.l.b16 %v396
        %v624 = vunpack.c.h.b16 %v396
        %v625 = vunpack.c.l.b16 %v397
        %v626 = vunpack.c.h.b16 %v397
        %v627 = vunpack.c.l.b16 %v398
        %v628 = vunpack.c.h.b16 %v398
        %v629 = vunpack.c.l.b16 %v399
        %v630 = vunpack.c.h.b16 %v399
        %v631 = vunpack.c.l.b16 %v400
        %v632 = vunpack.c.h.b16 %v400
        %v633 = vunpack.c.l.b16 %v401
        %v634 = vunpack.c.h.b16 %v401
        %v635 = vunpack.c.l.b16 %v402
        %v636 = vunpack.c.h.b16 %v402
        %v637 = vunpack.c.l.b16 %v403
        %v638 = vunpack.c.h.b16 %v403
        %v639 = vunpack.c.l.b16 %v404
        %v640 = vunpack.c.h.b16 %v404
        %v641 = vunpack.c.l.b16 %v405
        %v642 = vunpack.c.h.b16 %v405
        %v643 = vunpack.c.l.b16 %v406
        %v644 = vunpack.c.h.b16 %v406
        %v645 = vunpack.c.l.b16 %v407
        %v646 = vunpack.c.h.b16 %v407
        %v647 = vunpack.c.l.b16 %v408
        %v648 = vunpack.c.h.b16 %v408
        %v649 = vunpack.c.l.b16 %v409
        %v650 = vunpack.c.h.b16 %v409
        %v651 = vunpack.c.l.b16 %v410
        %v652 = vunpack.c.h.b16 %v410
        %v653 = vunpack.c.l.b16 %v411
        %v654 = vunpack.c.h.b16 %v411
        %v655 = vunpack.c.l.b16 %v412
        %v656 = vunpack.c.h.b16 %v412
        %v657 = vunpack.c.l.b16 %v413
        %v658 = vunpack.c.h.b16 %v413
        %v659 = vunpack.c.l.b16 %v414
        %v660 = vunpack.c.h.b16 %v414
        %v661 = vunpack.c.l.b16 %v415
        %v662 = vunpack.c.h.b16 %v415
        %v663 = vunpack.c.l.b16 %v416
        %v664 = vunpack.c.h.b16 %v416
        %v665 = vunpack.c.l.b16 %v417
        %v666 = vunpack.c.h.b16 %v417
        %v667 = vunpack.c.l.b16 %v418
        %v668 = vunpack.c.h.b16 %v418
        %v669 = vunpack.c.l.b16 %v419
        %v670 = vunpack.c.h.b16 %v419
        %v671 = vunpack.c.l.b16 %v420
        %v672 = vunpack.c.h.b16 %v420
        %v673 = vunpack.c.l.b16 %v421
        %v674 = vunpack.c.h.b16 %v421
        %v675 = vunpack.c.l.b16 %v422
        %v676 = vunpack.c.h.b16 %v422
        %v677 = vunpack.c.l.b16 %v423
        %v678 = vunpack.c.h.b16 %v423
        %v679 = vunpack.c.l.b16 %v424
        %v680 = vunpack.c.h.b16 %v424
        %v681 = vunpack.c.l.b16 %v425
        %v682 = vunpack.c.h.b16 %v425
        %v683 = vunpack.c.l.b16 %v426
        %v684 = vunpack.c.h.b16 %v426
        %v685 = vunpack.c.l.b16 %v427
        %v686 = vunpack.c.h.b16 %v427
        %v687 = vunpack.c.l.b16 %v428
        %v688 = vunpack.c.h.b16 %v428
        %v689 = vunpack.c.l.b16 %v429
        %v690 = vunpack.c.h.b16 %v429
        %v691 = vunpack.c.l.b16 %v430
        %v692 = vunpack.c.h.b16 %v430
        %v693 = vunpack.c.l.b16 %v431
        %v694 = vunpack.c.h.b16 %v431
        %v695 = vunpack.c.l.b16 %v432
        %v696 = vunpack.c.h.b16 %v432
        %v697 = vunpack.c.l.b16 %v433
        %v698 = vunpack.c.h.b16 %v433
        %v699 = vunpack.c.l.b16 %v434
        %v700 = vunpack.c.h.b16 %v434
        %v701 = vunpack.c.l.b16 %v435
        %v702 = vunpack.c.h.b16 %v435
        %v703 = vunpack.c.l.b16 %v436
        %v704 = vunpack.c.h.b16 %v436
        %v705 = vunpack.c.l.b16 %v437
        %v706 = vunpack.c.h.b16 %v437
        %v707 = vunpack.c.l.b16 %v438
        %v708 = vunpack.c.h.b16 %v438
        %v709 = vunpack.c.l.b16 %v439
        %v710 = vunpack.c.h.b16 %v439
        %v711 = vunpack.c.l.b16 %v440
        %v712 = vunpack.c.h.b16 %v440
        %v713 = vpack.c.b16 %v587, %v585
        %v714 = vpack.c.b16 %v588, %v586
        %v715 = vpack.c.b16 %v591, %v589
        %v716 = vpack.c.b16 %v592, %v590
        %v717 = vpack.c.b16 %v595, %v593
        %v718 = vpack.c.b16 %v596, %v594
        %v719 = vpack.c.b16 %v599, %v597
        %v720 = vpack.c.b16 %v600, %v598
        %v721 = vpack.c.b16 %v603, %v601
        %v722 = vpack.c.b16 %v604, %v602
        %v723 = vpack.c.b16 %v607, %v605
        %v724 = vpack.c.b16 %v608, %v606
        %v725 = vpack.c.b16 %v611, %v609
        %v726 = vpack.c.b16 %v612, %v610
        %v727 = vpack.c.b16 %v615, %v613
        %v728 = vpack.c.b16 %v616, %v614
        %v729 = vpack.c.b16 %v619, %v617
        %v730 = vpack.c.b16 %v620, %v618
        %v731 = vpack.c.b16 %v623, %v621
        %v732 = vpack.c.b16 %v624, %v622
        %v733 = vpack.c.b16 %v627, %v625
        %v734 = vpack.c.b16 %v628, %v626
        %v735 = vpack.c.b16 %v631, %v629
        %v736 = vpack.c.b16 %v632, %v630
        %v737 = vpack.c.b16 %v635, %v633
        %v738 = vpack.c.b16 %v636, %v634
        %v739 = vpack.c.b16 %v639, %v637
        %v740 = vpack.c.b16 %v640, %v638
        %v741 = vpack.c.b16 %v643, %v641
        %v742 = vpack.c.b16 %v644, %v642
        %v743 = vpack.c.b16 %v647, %v645
        %v744 = vpack.c.b16 %v648, %v646
        %v745 = vpack.c.b16 %v651, %v649
        %v746 = vpack.c.b16 %v652, %v650
        %v747 = vpack.c.b16 %v655, %v653
        %v748 = vpack.c.b16 %v656, %v654
        %v749 = vpack.c.b16 %v659, %v657
        %v750 = vpack.c.b16 %v660, %v658
        %v751 = vpack.c.b16 %v663, %v661
        %v752 = vpack.c.b16 %v664, %v662
        %v753 = vpack.c.b16 %v667, %v665
        %v754 = vpack.c.b16 %v668, %v666
        %v755 = vpack.c.b16 %v671, %v669
        %v756 = vpack.c.b16 %v672, %v670
        %v757 = vpack.c.b16 %v675, %v673
        %v758 = vpack.c.b16 %v676, %v674
        %v759 = vpack.c.b16 %v679, %v677
        %v760 = vpack.c.b16 %v680, %v678
        %v761 = vpack.c.b16 %v683, %v681
        %v762 = vpack.c.b16 %v684, %v682
        %v763 = vpack.c.b16 %v687, %v685
        %v764 = vpack.c.b16 %v688, %v686
        %v765 = vpack.c.b16 %v691, %v689
        %v766 = vpack.c.b16 %v692, %v690
        %v767 = vpack.c.b16 %v695, %v693
        %v768 = vpack.c.b16 %v696, %v694
        %v769 = vpack.c.b16 %v699, %v697
        %v770 = vpack.c.b16 %v700, %v698
        %v771 = vpack.c.b16 %v703, %v701
        %v772 = vpack.c.b16 %v704, %v702
        %v773 = vpack.c.b16 %v707, %v705
        %v774 = vpack.c.b16 %v708, %v706
        %v775 = vpack.c.b16 %v711, %v709
        %v776 = vpack.c.b16 %v712, %v710
        %841 = vmatprep.subr.bf16.mxu0 %v714
        %842 = vmatpush1.bf16.msra.mxu0 %v713
        %843 = vmatprep.subr.bf16.mxu0 %v716
        %844 = vmatpush1.bf16.msra.mxu0 %v715
        %845 = vmatprep.subr.bf16.mxu0 %v718
        %846 = vmatpush1.bf16.msra.mxu0 %v717
        %847 = vmatprep.subr.bf16.mxu0 %v720
        %848 = vmatpush1.bf16.msra.mxu0 %v719
        %849 = vmatprep.subr.bf16.mxu0 %v722
        %850 = vmatpush1.bf16.msra.mxu0 %v721
        %851 = vmatprep.subr.bf16.mxu0 %v724
        %852 = vmatpush1.bf16.msra.mxu0 %v723
        %853 = vmatprep.subr.bf16.mxu0 %v726
        %854 = vmatpush1.bf16.msra.mxu0 %v725
        %855 = vmatprep.subr.bf16.mxu0 %v728
        %856 = vmatpush1.bf16.msra.mxu0 %v727
        %857 = vmatprep.subr.bf16.mxu0 %v730
        %858 = vmatpush1.bf16.msra.mxu0 %v729
        %859 = vmatprep.subr.bf16.mxu0 %v732
        %860 = vmatpush1.bf16.msra.mxu0 %v731
        %861 = vmatprep.subr.bf16.mxu0 %v734
        %862 = vmatpush1.bf16.msra.mxu0 %v733
        %863 = vmatprep.subr.bf16.mxu0 %v736
        %864 = vmatpush1.bf16.msra.mxu0 %v735
        %865 = vmatprep.subr.bf16.mxu0 %v738
        %866 = vmatpush1.bf16.msra.mxu0 %v737
        %867 = vmatprep.subr.bf16.mxu0 %v740
        %868 = vmatpush1.bf16.msra.mxu0 %v739
        %869 = vmatprep.subr.bf16.mxu0 %v742
        %870 = vmatpush1.bf16.msra.mxu0 %v741
        %871 = vmatprep.subr.bf16.mxu0 %v744
        %872 = vmatpush1.bf16.msra.mxu0 %v743
        %873 = vmatprep.mubr.bf16.mxu0 %v490
        %874 = vmatmul.mubr.bf16.gmra.mrb[0].mxu0 %v489
        %v875 = vpop.f32.mrb[0].mxu0
        %v876 = vadd.f32 0.0, %v875
        %v877 = vpop.f32.mrb[0].mxu0
        %v878 = vadd.f32 0.0, %v877
        %v879 = vpop.f32.mrb[0].mxu0
        %v880 = vadd.f32 0.0, %v879
        %v881 = vpop.f32.mrb[0].mxu0
        %v882 = vadd.f32 0.0, %v881
        %883 = vmatprep.mubr.bf16.mxu0 %v494
        %884 = vmatmul.mubr.bf16.gmra.mrb[0].mxu0 %v493
        %v885 = vpop.f32.mrb[0].mxu0
        %v886 = vadd.f32 0.0, %v885
        %v887 = vpop.f32.mrb[0].mxu0
        %v888 = vadd.f32 0.0, %v887
        %v889 = vpop.f32.mrb[0].mxu0
        %v890 = vadd.f32 0.0, %v889
        %v891 = vpop.f32.mrb[0].mxu0
        %v892 = vadd.f32 0.0, %v891
        %893 = vmatprep.mubr.bf16.mxu0 %v498
        %894 = vmatmul.mubr.bf16.gmra.mrb[0].mxu0 %v497
        %v895 = vpop.f32.mrb[0].mxu0
        %v896 = vadd.f32 0.0, %v895
        %v897 = vpop.f32.mrb[0].mxu0
        %v898 = vadd.f32 0.0, %v897
        %v899 = vpop.f32.mrb[0].mxu0
        %v900 = vadd.f32 0.0, %v899
        %v901 = vpop.f32.mrb[0].mxu0
        %v902 = vadd.f32 0.0, %v901
        %903 = vmatprep.mubr.bf16.mxu0 %v502
        %904 = vmatmul.mubr.bf16.gmra.mrb[0].mxu0 %v501
        %v905 = vpop.f32.mrb[0].mxu0
        %v906 = vadd.f32 0.0, %v905
        %v907 = vpop.f32.mrb[0].mxu0
        %v908 = vadd.f32 0.0, %v907
        %v909 = vpop.f32.mrb[0].mxu0
        %v910 = vadd.f32 0.0, %v909
        %v911 = vpop.f32.mrb[0].mxu0
        %v912 = vadd.f32 0.0, %v911
        %913 = vdwg.mxu0
        %914 = vmatprep.subr.bf16.mxu0 %v746
        %915 = vmatpush1.bf16.msra.mxu0 %v745
        %916 = vmatprep.subr.bf16.mxu0 %v748
        %917 = vmatpush1.bf16.msra.mxu0 %v747
        %918 = vmatprep.subr.bf16.mxu0 %v750
        %919 = vmatpush1.bf16.msra.mxu0 %v749
        %920 = vmatprep.subr.bf16.mxu0 %v752
        %921 = vmatpush1.bf16.msra.mxu0 %v751
        %922 = vmatprep.subr.bf16.mxu0 %v754
        %923 = vmatpush1.bf16.msra.mxu0 %v753
        %924 = vmatprep.subr.bf16.mxu0 %v756
        %925 = vmatpush1.bf16.msra.mxu0 %v755
        %926 = vmatprep.subr.bf16.mxu0 %v758
        %927 = vmatpush1.bf16.msra.mxu0 %v757
        %928 = vmatprep.subr.bf16.mxu0 %v760
        %929 = vmatpush1.bf16.msra.mxu0 %v759
        %930 = vmatprep.subr.bf16.mxu0 %v762
        %931 = vmatpush1.bf16.msra.mxu0 %v761
        %932 = vmatprep.subr.bf16.mxu0 %v764
        %933 = vmatpush1.bf16.msra.mxu0 %v763
        %934 = vmatprep.subr.bf16.mxu0 %v766
        %935 = vmatpush1.bf16.msra.mxu0 %v765
        %936 = vmatprep.subr.bf16.mxu0 %v768
        %937 = vmatpush1.bf16.msra.mxu0 %v767
        %938 = vmatprep.subr.bf16.mxu0 %v770
        %939 = vmatpush1.bf16.msra.mxu0 %v769
        %940 = vmatprep.subr.bf16.mxu0 %v772
        %941 = vmatpush1.bf16.msra.mxu0 %v771
        %942 = vmatprep.subr.bf16.mxu0 %v774
        %943 = vmatpush1.bf16.msra.mxu0 %v773
        %944 = vmatprep.subr.bf16.mxu0 %v776
        %945 = vmatpush1.bf16.msra.mxu0 %v775
        %946 = vmatprep.mubr.bf16.mxu0 %v492
        %947 = vmatmul.mubr.bf16.gmra.mrb[0].mxu0 %v491
        %v948 = vpop.f32.mrb[0].mxu0
        %v949 = vadd.f32 %v876, %v948
        %v950 = vpop.f32.mrb[0].mxu0
        %v951 = vadd.f32 %v878, %v950
        %v952 = vpop.f32.mrb[0].mxu0
        %v953 = vadd.f32 %v880, %v952
        %v954 = vpop.f32.mrb[0].mxu0
        %v955 = vadd.f32 %v882, %v954
        %956 = vmatprep.mubr.bf16.mxu0 %v496
        %957 = vmatmul.mubr.bf16.gmra.mrb[0].mxu0 %v495
        %v958 = vpop.f32.mrb[0].mxu0
        %v959 = vadd.f32 %v886, %v958
        %v960 = vpop.f32.mrb[0].mxu0
        %v961 = vadd.f32 %v888, %v960
        %v962 = vpop.f32.mrb[0].mxu0
        %v963 = vadd.f32 %v890, %v962
        %v964 = vpop.f32.mrb[0].mxu0
        %v965 = vadd.f32 %v892, %v964
        %966 = vmatprep.mubr.bf16.mxu0 %v500
        %967 = vmatmul.mubr.bf16.gmra.mrb[0].mxu0 %v499
        %v968 = vpop.f32.mrb[0].mxu0
        %v969 = vadd.f32 %v896, %v968
        %v970 = vpop.f32.mrb[0].mxu0
        %v971 = vadd.f32 %v898, %v970
        %v972 = vpop.f32.mrb[0].mxu0
        %v973 = vadd.f32 %v900, %v972
        %v974 = vpop.f32.mrb[0].mxu0
        %v975 = vadd.f32 %v902, %v974
        %976 = vmatprep.mubr.bf16.mxu0 %v504
        %977 = vmatmul.mubr.bf16.gmra.mrb[0].mxu0 %v503
        %v978 = vpop.f32.mrb[0].mxu0
        %v979 = vadd.f32 %v906, %v978
        %v980 = vpop.f32.mrb[0].mxu0
        %v981 = vadd.f32 %v908, %v980
        %v982 = vpop.f32.mrb[0].mxu0
        %v983 = vadd.f32 %v910, %v982
        %v984 = vpop.f32.mrb[0].mxu0
        %v985 = vadd.f32 %v912, %v984
        %986 = vdwg.mxu0
        %v987 = vadd.f32 %v345, %v949
        %v988 = vadd.f32 %v346, %v951
        %v989 = vadd.f32 %v347, %v953
        %v990 = vadd.f32 %v348, %v955
        %v991 = vadd.f32 %v349, %v959
        %v992 = vadd.f32 %v350, %v961
        %v993 = vadd.f32 %v351, %v963
        %v994 = vadd.f32 %v352, %v965
        %v995 = vadd.f32 %v353, %v969
        %v996 = vadd.f32 %v354, %v971
        %v997 = vadd.f32 %v355, %v973
        %v998 = vadd.f32 %v356, %v975
        %v999 = vadd.f32 %v357, %v979
        %v1000 = vadd.f32 %v358, %v981
        %v1001 = vadd.f32 %v359, %v983
        %v1002 = vadd.f32 %v360, %v985
        %1003 = vst [vmem:[#allocation2] sm:$0xff] %v987
        %1004 = vst [vmem:[#allocation2 + $0x8] sm:$0xff] %v988
        %1005 = vst [vmem:[#allocation2 + $0x10] sm:$0xff] %v989
        %1006 = vst [vmem:[#allocation2 + $0x18] sm:$0xff] %v990
        %1007 = vst [vmem:[#allocation2 + $0x20] sm:$0xff] %v991
        %1008 = vst [vmem:[#allocation2 + $0x28] sm:$0xff] %v992
        %1009 = vst [vmem:[#allocation2 + $0x30] sm:$0xff] %v993
        %1010 = vst [vmem:[#allocation2 + $0x38] sm:$0xff] %v994
        %1011 = vst [vmem:[#allocation2 + $0x40] sm:$0xff] %v995
        %1012 = vst [vmem:[#allocation2 + $0x48] sm:$0xff] %v996
        %1013 = vst [vmem:[#allocation2 + $0x50] sm:$0xff] %v997
        %1014 = vst [vmem:[#allocation2 + $0x58] sm:$0xff] %v998
        %1015 = vst [vmem:[#allocation2 + $0x60] sm:$0xff] %v999
        %1016 = vst [vmem:[#allocation2 + $0x68] sm:$0xff] %v1000
        %1017 = vst [vmem:[#allocation2 + $0x70] sm:$0xff] %v1001
        %1018 = vst [vmem:[#allocation2 + $0x78] sm:$0xff] %v1002
        %p1019 = scmp.eq.s32.totalorder %s28, 1
        // Predicated region
        $region57: #{tpu_custom_call.1} parent=39 // pred_check
          %p1020 = pneg %p1019
        $region58: #{tpu_custom_call.1} parent=39 // pred_check_branch
          %1022 = sbr.rel (%p1020) target = $region60
        $region59: #{tpu_custom_call.1} parent=39 // pred_region
          %v1023 = vld [vmem:[#allocation2] sm:$0xff]
          %v1024 = vld [vmem:[#allocation2 + $0x8] sm:$0xff]
          %v1025 = vld [vmem:[#allocation2 + $0x10] sm:$0xff]
          %v1026 = vld [vmem:[#allocation2 + $0x18] sm:$0xff]
          %v1027 = vld [vmem:[#allocation2 + $0x20] sm:$0xff]
          %v1028 = vld [vmem:[#allocation2 + $0x28] sm:$0xff]
          %v1029 = vld [vmem:[#allocation2 + $0x30] sm:$0xff]
          %v1030 = vld [vmem:[#allocation2 + $0x38] sm:$0xff]
          %v1031 = vld [vmem:[#allocation2 + $0x40] sm:$0xff]
          %v1032 = vld [vmem:[#allocation2 + $0x48] sm:$0xff]
          %v1033 = vld [vmem:[#allocation2 + $0x50] sm:$0xff]
          %v1034 = vld [vmem:[#allocation2 + $0x58] sm:$0xff]
          %v1035 = vld [vmem:[#allocation2 + $0x60] sm:$0xff]
          %v1036 = vld [vmem:[#allocation2 + $0x68] sm:$0xff]
          %v1037 = vld [vmem:[#allocation2 + $0x70] sm:$0xff]
          %v1038 = vld [vmem:[#allocation2 + $0x78] sm:$0xff]
          %v1039 = vmax.f32 %v1023, 0.0
          %v1040 = vmax.f32 %v1024, 0.0
          %v1041 = vmax.f32 %v1025, 0.0
          %v1042 = vmax.f32 %v1026, 0.0
          %v1043 = vmax.f32 %v1027, 0.0
          %v1044 = vmax.f32 %v1028, 0.0
          %v1045 = vmax.f32 %v1029, 0.0
          %v1046 = vmax.f32 %v1030, 0.0
          %v1047 = vmax.f32 %v1031, 0.0
          %v1048 = vmax.f32 %v1032, 0.0
          %v1049 = vmax.f32 %v1033, 0.0
          %v1050 = vmax.f32 %v1034, 0.0
          %v1051 = vmax.f32 %v1035, 0.0
          %v1052 = vmax.f32 %v1036, 0.0
          %v1053 = vmax.f32 %v1037, 0.0
          %v1054 = vmax.f32 %v1038, 0.0
          %v1055 = vpack.c.bf16 %v1041, %v1039
          %v1056 = vpack.c.bf16 %v1042, %v1040
          %v1057 = vpack.c.bf16 %v1045, %v1043
          %v1058 = vpack.c.bf16 %v1046, %v1044
          %v1059 = vpack.c.bf16 %v1049, %v1047
          %v1060 = vpack.c.bf16 %v1050, %v1048
          %v1061 = vpack.c.bf16 %v1053, %v1051
          %v1062 = vpack.c.bf16 %v1054, %v1052
          %v1063 = vld [vmem:[#allocation8] sm:$0xf]
          %v1064 = vld [vmem:[#allocation8 + $0x4] sm:$0xf]
          %v1065 = vld [vmem:[#allocation8 + $0x8] sm:$0xf]
          %v1066 = vld [vmem:[#allocation8 + $0xc] sm:$0xf]
          %v1067 = vld [vmem:[#allocation8 + $0x10] sm:$0xf]
          %v1068 = vld [vmem:[#allocation8 + $0x14] sm:$0xf]
          %v1069 = vld [vmem:[#allocation8 + $0x18] sm:$0xf]
          %v1070 = vld [vmem:[#allocation8 + $0x1c] sm:$0xf]
          %v1071 = vld [vmem:[#allocation8 + $0x20] sm:$0xf]
          %v1072 = vld [vmem:[#allocation8 + $0x24] sm:$0xf]
          %v1073 = vld [vmem:[#allocation8 + $0x28] sm:$0xf]
          %v1074 = vld [vmem:[#allocation8 + $0x2c] sm:$0xf]
          %v1075 = vld [vmem:[#allocation8 + $0x30] sm:$0xf]
          %v1076 = vld [vmem:[#allocation8 + $0x34] sm:$0xf]
          %v1077 = vld [vmem:[#allocation8 + $0x38] sm:$0xf]
          %v1078 = vld [vmem:[#allocation8 + $0x3c] sm:$0xf]
          %v1079 = vld [vmem:[#allocation8 + $0x40] sm:$0xf]
          %v1080 = vld [vmem:[#allocation8 + $0x44] sm:$0xf]
          %v1081 = vld [vmem:[#allocation8 + $0x48] sm:$0xf]
          %v1082 = vld [vmem:[#allocation8 + $0x4c] sm:$0xf]
          %v1083 = vld [vmem:[#allocation8 + $0x50] sm:$0xf]
          %v1084 = vld [vmem:[#allocation8 + $0x54] sm:$0xf]
          %v1085 = vld [vmem:[#allocation8 + $0x58] sm:$0xf]
          %v1086 = vld [vmem:[#allocation8 + $0x5c] sm:$0xf]
          %v1087 = vld [vmem:[#allocation8 + $0x60] sm:$0xf]
          %v1088 = vld [vmem:[#allocation8 + $0x64] sm:$0xf]
          %v1089 = vld [vmem:[#allocation8 + $0x68] sm:$0xf]
          %v1090 = vld [vmem:[#allocation8 + $0x6c] sm:$0xf]
          %v1091 = vld [vmem:[#allocation8 + $0x70] sm:$0xf]
          %v1092 = vld [vmem:[#allocation8 + $0x74] sm:$0xf]
          %v1093 = vld [vmem:[#allocation8 + $0x78] sm:$0xf]
          %v1094 = vld [vmem:[#allocation8 + $0x7c] sm:$0xf]
          %v1095 = vld [vmem:[%s4] sm:$0x1]
          %v1097 = vlaneseq
          %v1098 = vshrl.u32 %v1097, 7
          %v1099 = vsub.s32 0, %v1098
          %v1100 = vrot.slane %v1095, %v1099
          %v1134 = vunpack.c.l.b16 %v1063
          %v1135 = vunpack.c.l.b16 %v1064
          %v1136 = vunpack.c.l.b16 %v1065
          %v1137 = vunpack.c.l.b16 %v1066
          %v1138 = vunpack.c.l.b16 %v1067
          %v1139 = vunpack.c.l.b16 %v1068
          %v1140 = vunpack.c.l.b16 %v1069
          %v1141 = vunpack.c.l.b16 %v1070
          %v1142 = vunpack.c.l.b16 %v1071
          %v1143 = vunpack.c.l.b16 %v1072
          %v1144 = vunpack.c.l.b16 %v1073
          %v1145 = vunpack.c.l.b16 %v1074
          %v1146 = vunpack.c.l.b16 %v1075
          %v1147 = vunpack.c.l.b16 %v1076
          %v1148 = vunpack.c.l.b16 %v1077
          %v1149 = vunpack.c.l.b16 %v1078
          %v1150 = vunpack.c.l.b16 %v1079
          %v1151 = vunpack.c.l.b16 %v1080
          %v1152 = vunpack.c.l.b16 %v1081
          %v1153 = vunpack.c.l.b16 %v1082
          %v1154 = vunpack.c.l.b16 %v1083
          %v1155 = vunpack.c.l.b16 %v1084
          %v1156 = vunpack.c.l.b16 %v1085
          %v1157 = vunpack.c.l.b16 %v1086
          %v1158 = vunpack.c.l.b16 %v1087
          %v1159 = vunpack.c.l.b16 %v1088
          %v1160 = vunpack.c.l.b16 %v1089
          %v1161 = vunpack.c.l.b16 %v1090
          %v1162 = vunpack.c.l.b16 %v1091
          %v1163 = vunpack.c.l.b16 %v1092
          %v1164 = vunpack.c.l.b16 %v1093
          %v1165 = vunpack.c.l.b16 %v1094
          %v1166 = vpack.c.b16 %v1135, %v1134
          %v1167 = vpack.c.b16 %v1137, %v1136
          %v1168 = vpack.c.b16 %v1139, %v1138
          %v1169 = vpack.c.b16 %v1141, %v1140
          %v1170 = vpack.c.b16 %v1143, %v1142
          %v1171 = vpack.c.b16 %v1145, %v1144
          %v1172 = vpack.c.b16 %v1147, %v1146
          %v1173 = vpack.c.b16 %v1149, %v1148
          %v1174 = vpack.c.b16 %v1151, %v1150
          %v1175 = vpack.c.b16 %v1153, %v1152
          %v1176 = vpack.c.b16 %v1155, %v1154
          %v1177 = vpack.c.b16 %v1157, %v1156
          %v1178 = vpack.c.b16 %v1159, %v1158
          %v1179 = vpack.c.b16 %v1161, %v1160
          %v1180 = vpack.c.b16 %v1163, %v1162
          %v1181 = vpack.c.b16 %v1165, %v1164
          %1198 = vmatprep.subr.bf16.mxu0 0
          %1199 = vmatpush1.bf16.msra.mxu0 %v1166
          %1200 = vmatprep.subr.bf16.mxu0 0
          %1201 = vmatpush1.bf16.msra.mxu0 %v1167
          %1202 = vmatprep.subr.bf16.mxu0 0
          %1203 = vmatpush1.bf16.msra.mxu0 %v1168
          %1204 = vmatprep.subr.bf16.mxu0 0
          %1205 = vmatpush1.bf16.msra.mxu0 %v1169
          %1206 = vmatprep.subr.bf16.mxu0 0
          %1207 = vmatpush1.bf16.msra.mxu0 %v1170
          %1208 = vmatprep.subr.bf16.mxu0 0
          %1209 = vmatpush1.bf16.msra.mxu0 %v1171
          %1210 = vmatprep.subr.bf16.mxu0 0
          %1211 = vmatpush1.bf16.msra.mxu0 %v1172
          %1212 = vmatprep.subr.bf16.mxu0 0
          %1213 = vmatpush1.bf16.msra.mxu0 %v1173
          %1214 = vmatprep.subr.bf16.mxu0 0
          %1215 = vmatpush1.bf16.msra.mxu0 %v1174
          %1216 = vmatprep.subr.bf16.mxu0 0
          %1217 = vmatpush1.bf16.msra.mxu0 %v1175
          %1218 = vmatprep.subr.bf16.mxu0 0
          %1219 = vmatpush1.bf16.msra.mxu0 %v1176
          %1220 = vmatprep.subr.bf16.mxu0 0
          %1221 = vmatpush1.bf16.msra.mxu0 %v1177
          %1222 = vmatprep.subr.bf16.mxu0 0
          %1223 = vmatpush1.bf16.msra.mxu0 %v1178
          %1224 = vmatprep.subr.bf16.mxu0 0
          %1225 = vmatpush1.bf16.msra.mxu0 %v1179
          %1226 = vmatprep.subr.bf16.mxu0 0
          %1227 = vmatpush1.bf16.msra.mxu0 %v1180
          %1228 = vmatprep.subr.bf16.mxu0 0
          %1229 = vmatpush1.bf16.msra.mxu0 %v1181
          %1230 = vmatprep.mubr.bf16.mxu0 %v1056
          %1231 = vmatmul.mubr.bf16.gmra.mrb[0].mxu0 %v1055
          %v1232 = vpop.f32.mrb[0].mxu0
          %v1233 = vadd.f32 %v1100, %v1232
          %v1234 = vpop.f32.mrb[0].mxu0
          %v1235 = vpop.f32.mrb[0].mxu0
          %v1236 = vadd.f32 %v1100, %v1235
          %v1237 = vpop.f32.mrb[0].mxu0
          %1238 = vmatprep.mubr.bf16.mxu0 %v1058
          %1239 = vmatmul.mubr.bf16.gmra.mrb[0].mxu0 %v1057
          %v1240 = vpop.f32.mrb[0].mxu0
          %v1241 = vadd.f32 %v1100, %v1240
          %v1242 = vpop.f32.mrb[0].mxu0
          %v1243 = vpop.f32.mrb[0].mxu0
          %v1244 = vadd.f32 %v1100, %v1243
          %v1245 = vpop.f32.mrb[0].mxu0
          %1246 = vmatprep.mubr.bf16.mxu0 %v1060
          %1247 = vmatmul.mubr.bf16.gmra.mrb[0].mxu0 %v1059
          %v1248 = vpop.f32.mrb[0].mxu0
          %v1249 = vadd.f32 %v1100, %v1248
          %v1250 = vpop.f32.mrb[0].mxu0
          %v1251 = vpop.f32.mrb[0].mxu0
          %v1252 = vadd.f32 %v1100, %v1251
          %v1253 = vpop.f32.mrb[0].mxu0
          %1254 = vmatprep.mubr.bf16.mxu0 %v1062
          %1255 = vmatmul.mubr.bf16.gmra.mrb[0].mxu0 %v1061
          %v1256 = vpop.f32.mrb[0].mxu0
          %v1257 = vadd.f32 %v1100, %v1256
          %v1258 = vpop.f32.mrb[0].mxu0
          %v1259 = vpop.f32.mrb[0].mxu0
          %v1260 = vadd.f32 %v1100, %v1259
          %v1261 = vpop.f32.mrb[0].mxu0
          %1262 = vdwg.mxu0
          %1263 = vst [vmem:[#allocation9] sm:$0xff] %v1233
          %1264 = vst [vmem:[#allocation9 + $0x8] sm:$0xff] %v1236
          %1265 = vst [vmem:[#allocation9 + $0x10] sm:$0xff] %v1241
          %1266 = vst [vmem:[#allocation9 + $0x18] sm:$0xff] %v1244
          %1267 = vst [vmem:[#allocation9 + $0x20] sm:$0xff] %v1249
          %1268 = vst [vmem:[#allocation9 + $0x28] sm:$0xff] %v1252
          %1269 = vst [vmem:[#allocation9 + $0x30] sm:$0xff] %v1257
          %1270 = vst [vmem:[#allocation9 + $0x38] sm:$0xff] %v1260
        $region60: #{tpu_custom_call.1} parent=39 // pred_fallthru
          _
        // Predicated region
        $region61: #{tpu_custom_call.1} parent=39 // pred_check
          %p1271 = pneg %p170
        $region62: #{tpu_custom_call.1} parent=39 // pred_check_branch
          %1273 = sbr.rel (%p1271) target = $region64
        $region63: #{tpu_custom_call.1} parent=39 // pred_region
          %s1274 = smul.u32 8, %s27
          %s1276 = ssub.s32 1024, 1024
          %1277 = vsyncadd [#allocation5], %s1276
          %s1278 = smul.addr %s1274, 128
          %s1279 = scalar_lea.hbm %s5, %s1278
          %s1280 = sshll.u32 [#allocation9], 4
          %s1281 = int_to_ptr.vmem [resolvable:$true] %s1280
          %1286 = dma.vmem_to_hbm [thread:$0]  %s1281, 1024, %s1279, [#allocation5], 128, 128, 8
        $region64: #{tpu_custom_call.1} parent=39 // pred_fallthru
          _
        // Predicated region
        $region65: #{tpu_custom_call.1} parent=39 // pred_check
          %p1287 = pneg %p170
        $region66: #{tpu_custom_call.1} parent=39 // pred_check_branch
          %1289 = sbr.rel (%p1287) target = $region68
        $region67: #{tpu_custom_call.1} parent=39 // pred_region
          %1290 = dma.done [#allocation5], 1024
        $region68: #{tpu_custom_call.1} parent=39 // pred_fallthru
          _
      $region40: #{tpu_custom_call.1} parent=5 // pred_fallthru
        _
      %p1291 = scmp.le.s32.totalorder 2, %s18
      // Predicated region
      $region69: #{tpu_custom_call.1} parent=5 // pred_check
        %p1292 = pneg %p1291
      $region70: #{tpu_custom_call.1} parent=5 // pred_check_branch
        %1294 = sbr.rel (%p1292) target = $region72
      $region71: #{tpu_custom_call.1} parent=5 // pred_region
        %s1295 = ssub.s32 %s18, 2
      $region72: #{tpu_custom_call.1} parent=5 // pred_fallthru
        _
    $region6: #{tpu_custom_call.1} parent=1 // loop_footer
      %s22 = sadd.s32 1, %s18
    $region7: #{tpu_custom_call.1} parent=1 // loop_footer_branch
      %17 = sbr.rel target = $region3
    $region8: #{tpu_custom_call.1} parent=1 // loop_exit
      _
    %1296 = vsyncpa [#allocation4], 1
    %s1297 = scalar_lea.sflag [#allocation4], 1
    %1298 = vsyncpa %s1297, 1
    %1299 = vsyncpa [#allocation7], 1
    %s1300 = scalar_lea.sflag [#allocation7], 1
    %1301 = vsyncpa %s1300, 1
    %1302 = vsyncpa [#allocation5], 1
    %s1303 = scalar_lea.sflag [#allocation5], 1
    %1304 = vsyncpa %s1303, 1

</llo_original>
